<compile_context>
chip_gen: v7x
topology: tpu7x:2x2x1
jax: 0.10.0
libtpu: 0.0.40
codegen_flags: <defaults>
</compile_context>

<pallas_src>
import functools
import math

import jax
import jax.numpy as jnp
from jax.experimental import pallas as pl
from jax.experimental.pallas import tpu as pltpu


def _round_up(x, m):
    return (x + m - 1) // m * m


def _cdiv(a, b):
    return (a + b - 1) // b


def _layernorm_kernel(x_ref, a_ref, b_ref, o_ref, *, eps, d):
    """Row-wise LayerNorm with torch-std (unbiased, centered) semantics."""
    x = x_ref[...].astype(jnp.float32)                       # (tile_r, D)
    mean = jnp.sum(x, axis=-1, keepdims=True) * jnp.float32(1.0 / d)
    centered = x - mean
    # Two-pass centered variance, unbiased (N-1) divisor like torch.std.
    var = jnp.sum(centered * centered, axis=-1, keepdims=True) * jnp.float32(
        1.0 / (d - 1))
    std = jnp.sqrt(var)
    a = a_ref[...].astype(jnp.float32)                       # (1, D)
    b = b_ref[...].astype(jnp.float32)                       # (1, D)
    # Exact divide: the kernel is HBM-bandwidth bound, so the VALU/EUP cost of
    # the true reciprocal is hidden; no approximation error vs torch.
    o_ref[...] = (a * (centered / (std + jnp.float32(eps))) + b).astype(o_ref.dtype)


def pallas_layernorm(x, a_2, b_2, eps=1e-6):
    """LayerNorm over the last axis of x with torch-std semantics."""
    orig_shape = x.shape
    D = orig_shape[-1]
    rows = math.prod(orig_shape[:-1])
    # TODO(synk): D == 1 divides by (D-1)=0 in the unbiased estimator
    # (matches torch's NaN behaviour, left unguarded on purpose).

    dtype_size = jnp.dtype(x.dtype).itemsize
    # Sublane alignment for the row tile (f32: 8, 16-bit: 16, 8-bit: 32).
    row_align = max(8, 32 // max(dtype_size, 1))

    # --- Row-tile sizing, purely by bytes --------------------------------
    in_row_bytes = D * dtype_size          # one input row in HBM dtype
    out_row_bytes = D * dtype_size         # one output row
    f32_row_bytes = D * 4                  # in-kernel f32 temporaries
    # Per-step VMEM: double-buffered input + double-buffered output + ~2 f32
    # temps (x_f32 and the centered copy).  Keep it under ~36 MiB so it fits
    # comfortably on v7x (64 MiB VMEM) and leaves huge headroom on v5e/v6e.
    per_row_budget_bytes = 2 * in_row_bytes + 2 * out_row_bytes + 2 * f32_row_bytes
    vmem_budget_bytes = 36 * 1024 * 1024
    tile_r_budget = max(1, vmem_budget_bytes // per_row_budget_bytes)
    # Target ~8 MiB of raw input per tile (the budget above caps this down for
    # wide D / narrow dtypes); big tiles amortize the ~0.35 us per-step cost.
    target_in_bytes = 8 * 1024 * 1024
    tile_r_target = max(1, target_in_bytes // max(in_row_bytes, 1))
    tile_r = min(tile_r_budget, tile_r_target)
    tile_r = max(row_align, (tile_r // row_align) * row_align)

    # Keep >= ~4 grid steps on large inputs so both TensorCores on v7x stay
    # fed via dimension_semantics=("parallel",).
    min_steps = 4
    if rows >= min_steps * row_align:
        tile_r = min(tile_r, _round_up(_cdiv(rows, min_steps), row_align))
    # Never use a tile taller than the (sublane-rounded) row count.
    tile_r = min(tile_r, _round_up(rows, row_align))
    tile_r = max(row_align, tile_r)

    x2 = x.reshape(rows, D)
    a2 = a_2.reshape(1, D)
    b2 = b_2.reshape(1, D)

    # Partial last block (rows % tile_r != 0) is clamped/masked by Pallas; the
    # garbage rows only affect discarded output rows, so no padding is needed.
    grid = (pl.cdiv(rows, tile_r),)
    out = pl.pallas_call(
        functools.partial(_layernorm_kernel, eps=eps, d=D),
        out_shape=jax.ShapeDtypeStruct((rows, D), x.dtype),
        grid=grid,
        in_specs=[
            pl.BlockSpec((tile_r, D), lambda i: (i, 0)),
            pl.BlockSpec((1, D), lambda i: (0, 0)),
            pl.BlockSpec((1, D), lambda i: (0, 0)),
        ],
        out_specs=pl.BlockSpec((tile_r, D), lambda i: (i, 0)),
        compiler_params=pltpu.CompilerParams(
            # Independent row tiles -> shard the grid across both TCs on v7x.
            dimension_semantics=("parallel",),
            # Tiles are sized to ~<=36 MiB per step; 48 MiB leaves headroom on
            # every generation (v7x: 64 MiB physical, v5e/v6e: 128 MiB).
            vmem_limit_bytes=48 * 1024 * 1024,
        ),
    )(x2, a2, b2)

    return out.reshape(orig_shape)


class Encoder:
    """JAX/Pallas port of the abstract PyTorch Encoder.

    `layers` is a list of callables layer(x, mask) -> x (deep-copied clones in
    the original).  The final LayerNorm (the module's own parameters) runs as
    a Pallas TPU kernel.
    """

    def __init__(self, layer, N, size, eps=1e-6):
        # clones(layer, N): N independent copies of the same abstract layer.
        self.layers = [layer for _ in range(N)]
        # LayerNorm.__init__: a_2 = ones(features), b_2 = zeros(features).
        self.a_2 = jnp.ones((size,), dtype=jnp.float32)
        self.b_2 = jnp.zeros((size,), dtype=jnp.float32)
        self.eps = eps

    def __call__(self, x, mask):
        # "Pass the input (and Mask) through each layer in turn."
        for layer in self.layers:
            x = layer(x, mask)
        return pallas_layernorm(x, self.a_2, self.b_2, self.eps)


if __name__ == "__main__":
    # Small shapes consistent with a transformer encoder: batch=2, seq=8, hidden=32.
    B, S, D = 2, 8, 32
    N_LAYERS = 3

    key = jax.random.PRNGKey(0)
    kx, km = jax.random.split(key)
    x = jax.random.normal(kx, (B, S, D), dtype=jnp.float32)
    mask = jnp.ones((B, 1, S), dtype=jnp.float32)

    # TODO(synk): `layer` is an abstract constructor argument in the PyTorch
    # module (no concrete sublayer class is provided), so identity layers are
    # used here; the concrete compute (the final LayerNorm) runs in Pallas.
    identity_layer = lambda x, mask: x

    enc = Encoder(identity_layer, N_LAYERS, size=D)
    out = enc(x, mask)
    out = jax.block_until_ready(out)

    # Sanity check against a plain-JAX reference of the torch semantics
    # (exact division now -> tight tolerance).
    xf = x.astype(jnp.float32)
    mean = jnp.mean(xf, axis=-1, keepdims=True)
    std = jnp.sqrt(jnp.sum((xf - mean) ** 2, axis=-1, keepdims=True) / (D - 1))
    ref = enc.a_2 * (xf - mean) / (std + enc.eps) + enc.b_2
    assert out.shape == (B, S, D)
    err = float(jnp.max(jnp.abs(out - ref)))
    assert jnp.allclose(out, ref, atol=1e-5, rtol=1e-5), err

    print("KERNEL_OK")
</pallas_src>

<mosaic_0001>
module attributes {stable_mosaic.version = 11 : i64} {
  func.func @_layernorm_kernel(%arg0: i32, %arg1: memref<16x32xf32, #tpu.memory_space<vmem>>, %arg2: memref<1x32xf32, #tpu.memory_space<vmem>>, %arg3: memref<1x32xf32, #tpu.memory_space<vmem>>, %arg4: memref<16x32xf32, #tpu.memory_space<vmem>>) attributes {dimension_semantics = [#tpu.dimension_semantics<parallel>], iteration_bounds = array<i64: 1>, scalar_prefetch = 0 : i64, scratch_operands = 0 : i64, tpu.core_type = #tpu.core_type<tc>, window_params = [{transform_indices = @transform_0, window_bounds = array<i64: 16, 32>}, {pipeline_mode = #tpu.pipeline_mode<synchronous>, transform_indices = @transform_1, window_bounds = array<i64: 1, 32>}, {pipeline_mode = #tpu.pipeline_mode<synchronous>, transform_indices = @transform_2, window_bounds = array<i64: 1, 32>}, {transform_indices = @transform_3, window_bounds = array<i64: 16, 32>}]} {
    %c0 = arith.constant 0 : index
    %c0_0 = arith.constant 0 : index
    %0 = vector.load %arg1[%c0, %c0_0] : memref<16x32xf32, #tpu.memory_space<vmem>>, vector<16x32xf32>
    %cst = arith.constant dense<0.000000e+00> : vector<16xf32>
    %1 = vector.multi_reduction <add>, %0, %cst [1] : vector<16x32xf32> to vector<16xf32>
    %2 = vector.shape_cast %1 : vector<16xf32> to vector<16x1xf32>
    %cst_1 = arith.constant 3.125000e-02 : f32
    %3 = vector.broadcast %cst_1 : f32 to vector<16x1xf32>
    %4 = arith.mulf %2, %3 : vector<16x1xf32>
    %5 = vector.broadcast %4 : vector<16x1xf32> to vector<16x32xf32>
    %6 = arith.subf %0, %5 : vector<16x32xf32>
    %7 = arith.mulf %6, %6 : vector<16x32xf32>
    %cst_2 = arith.constant dense<0.000000e+00> : vector<16xf32>
    %8 = vector.multi_reduction <add>, %7, %cst_2 [1] : vector<16x32xf32> to vector<16xf32>
    %9 = vector.shape_cast %8 : vector<16xf32> to vector<16x1xf32>
    %cst_3 = arith.constant 0.0322580636 : f32
    %10 = vector.broadcast %cst_3 : f32 to vector<16x1xf32>
    %11 = arith.mulf %9, %10 : vector<16x1xf32>
    %12 = math.sqrt %11 : vector<16x1xf32>
    %c0_4 = arith.constant 0 : index
    %c0_5 = arith.constant 0 : index
    %13 = vector.load %arg2[%c0_4, %c0_5] : memref<1x32xf32, #tpu.memory_space<vmem>>, vector<1x32xf32>
    %c0_6 = arith.constant 0 : index
    %c0_7 = arith.constant 0 : index
    %14 = vector.load %arg3[%c0_6, %c0_7] : memref<1x32xf32, #tpu.memory_space<vmem>>, vector<1x32xf32>
    %cst_8 = arith.constant 9.99999997E-7 : f32
    %15 = vector.broadcast %cst_8 : f32 to vector<16x1xf32>
    %16 = arith.addf %12, %15 : vector<16x1xf32>
    %17 = vector.broadcast %16 : vector<16x1xf32> to vector<16x32xf32>
    %18 = arith.divf %6, %17 : vector<16x32xf32>
    %19 = vector.broadcast %13 : vector<1x32xf32> to vector<16x32xf32>
    %20 = arith.mulf %19, %18 : vector<16x32xf32>
    %21 = vector.broadcast %14 : vector<1x32xf32> to vector<16x32xf32>
    %22 = arith.addf %20, %21 : vector<16x32xf32>
    %c0_9 = arith.constant 0 : index
    %c0_10 = arith.constant 0 : index
    %23 = vector.load %arg4[%c0_9, %c0_10] : memref<16x32xf32, #tpu.memory_space<vmem>>, vector<16x32xf32>
    tpu.vector_store %arg4[%c0_9, %c0_10], %22 {strides = array<i32>} : memref<16x32xf32, #tpu.memory_space<vmem>>, vector<16x32xf32>,
    return
  }
  func.func @transform_0(%arg0: i32) -> (i32, i32) {
    %c0_i32 = arith.constant 0 : i32
    %c0_i32_0 = arith.constant 0 : i32
    return %arg0, %c0_i32 : i32, i32
  }
  func.func @transform_1(%arg0: i32) -> (i32, i32) {
    %c0_i32 = arith.constant 0 : i32
    %c0_i32_0 = arith.constant 0 : i32
    %c0_i32_1 = arith.constant 0 : i32
    return %c0_i32, %c0_i32_0 : i32, i32
  }
  func.func @transform_2(%arg0: i32) -> (i32, i32) {
    %c0_i32 = arith.constant 0 : i32
    %c0_i32_0 = arith.constant 0 : i32
    %c0_i32_1 = arith.constant 0 : i32
    return %c0_i32, %c0_i32_0 : i32, i32
  }
  func.func @transform_3(%arg0: i32) -> (i32, i32) {
    %c0_i32 = arith.constant 0 : i32
    %c0_i32_0 = arith.constant 0 : i32
    return %arg0, %c0_i32 : i32, i32
  }
}

</mosaic_0001>

<llo_original>
// kernel: tpu_custom_call.1
$region0: #{tpu_custom_call.1}
  #allocation0 [shape = 'u32[]', space=smem, size = 0x4, offset = 0x4, fixed_abs, tag = 'smem constant byte address 0x4 - core index']
  #allocation1 [shape = 'u32[144,128]{1,0:T(1,128)}', space=vmem, size = 0x12000, scoped, tag = 'internal scratch']
  %s0 = inlined_call_operand.hbm [shape: f32[16,32], index: 0, kind: input, shape index: {}]
  %s1 = inlined_call_operand.vmem [shape: f32[1,32], index: 1, kind: input, shape index: {}]
  %s2 = inlined_call_operand.vmem [shape: f32[1,32], index: 2, kind: input, shape index: {}]
  %s3 = inlined_call_operand.hbm [shape: f32[16,32], index: 3, kind: output, shape index: {}]
  %s4 = sld [smem:[#allocation0]]
  $region26: #{tpu_custom_call.1} parent=0
    _
  %s6 = ssub.s32 1, %s4
  %s7 = scalar_select 0, %s6, %s4
  $region1: #{tpu_custom_call.1} parent=0
    #allocation2 [shape = 'u8[8192]{0}', space=vmem, size = 0x2000, scoped, tag = 'input window, operand 0, single buffered']
    #allocation3 [shape = 's32[1]{0}', space=sflag, size = 0x4, scoped, tag = 'scoped memory for tpu_custom_call.1']
    #allocation4 [shape = 's32[1]{0}', space=sflag, size = 0x4, scoped, tag = 'scoped memory for tpu_custom_call.1']
    #allocation5 [shape = 'u8[8192]{0}', space=vmem, size = 0x2000, scoped, tag = 'output window, operand 0, single buffered']
    %8 = vsyncpa [#allocation3], 0
    %9 = vsyncpa [#allocation4], 0
    // Predicated region
    $region2: #{tpu_custom_call.1} parent=1 // pred_check
      _
    $region3: #{tpu_custom_call.1} parent=1 // pred_check_branch
      %11 = sbr.rel (0) target = $region5
    $region4: #{tpu_custom_call.1} parent=1 // pred_region
      %s13 = ssub.s32 256, 256
      %14 = vsyncadd [#allocation3], %s13
      %s15 = sshll.u32 [#allocation2], 4
      %s16 = int_to_ptr.vmem [resolvable:$true] %s15
      %21 = dma.hbm_to_vmem [thread:$0]  %s0, 256, %s16, [#allocation3], 128, 128, 8
    $region5: #{tpu_custom_call.1} parent=1 // pred_fallthru
      _
    // Predicated region
    $region6: #{tpu_custom_call.1} parent=1 // pred_check
      _
    $region7: #{tpu_custom_call.1} parent=1 // pred_check_branch
      %23 = sbr.rel (0) target = $region9
    $region8: #{tpu_custom_call.1} parent=1 // pred_region
      _
    $region9: #{tpu_custom_call.1} parent=1 // pred_fallthru
      _
    // Predicated region
    $region10: #{tpu_custom_call.1} parent=1 // pred_check
      _
    $region11: #{tpu_custom_call.1} parent=1 // pred_check_branch
      %25 = sbr.rel (0) target = $region13
    $region12: #{tpu_custom_call.1} parent=1 // pred_region
      _
    $region13: #{tpu_custom_call.1} parent=1 // pred_fallthru
      _
    // Predicated region
    $region14: #{tpu_custom_call.1} parent=1 // pred_check
      _
    $region15: #{tpu_custom_call.1} parent=1 // pred_check_branch
      %27 = sbr.rel (0) target = $region17
    $region16: #{tpu_custom_call.1} parent=1 // pred_region
      %28 = dma.done [#allocation3], 256
    $region17: #{tpu_custom_call.1} parent=1 // pred_fallthru
      _
    %v29 = vld [vmem:[#allocation2] sm:$0xff]
    %v30 = vld [vmem:[#allocation2 + $0x8] sm:$0xff]
    %vm31 = vcmask 261120
    %v32 = vsel %vm31, %v29, 0.0
    %33 = vadd.xlane.f32.xlu0 %v32
    %v34 = vpop.xlane.xlu0 %33
    %v35 = vsel %vm31, %v30, 0.0
    %36 = vadd.xlane.f32.xlu0 %v35
    %v37 = vpop.xlane.xlu0 %36
    %v38 = vmul.f32 %v34, 0.03125
    %v39 = vmul.f32 %v37, 0.03125
    %v40 = vsub.f32 %v29, %v38
    %v41 = vsub.f32 %v30, %v39
    %v42 = vmul.f32 %v40, %v40
    %v43 = vmul.f32 %v41, %v41
    %v44 = vsel %vm31, %v42, 0.0
    %45 = vadd.xlane.f32.xlu0 %v44
    %v46 = vpop.xlane.xlu0 %45
    %v47 = vsel %vm31, %v43, 0.0
    %48 = vadd.xlane.f32.xlu0 %v47
    %v49 = vpop.xlane.xlu0 %48
    %v50 = vmul.f32 %v46, 0.032258064
    %v51 = vmul.f32 %v49, 0.032258064
    %v52 = vrsqrt.pop %v50
    %v53 = vmul.f32 %v50, %v52
    %vm54 = vcmp.eq.f32.partialorder %v50, inf
    %v55 = vsel %vm54, %v50, %v53
    %vm56 = vcmp.eq.f32.partialorder %v50, 0.0
    %v57 = vand.u32 %v50, 2147483648
    %v58 = vsel %vm56, %v57, %v55
    %v59 = vrsqrt.pop %v51
    %v60 = vmul.f32 %v51, %v59
    %vm61 = vcmp.eq.f32.partialorder %v51, inf
    %v62 = vsel %vm61, %v51, %v60
    %vm63 = vcmp.eq.f32.partialorder %v51, 0.0
    %v64 = vand.u32 %v51, 2147483648
    %v65 = vsel %vm63, %v64, %v62
    %v66 = vld [vmem:[%s1] sm:$0x1]
    %v67 = vld [vmem:[%s2] sm:$0x1]
    %v68 = vadd.f32 %v58, 1e-06
    %v69 = vadd.f32 %v65, 1e-06
    %v70 = vrcp.pop %v68
    %v71 = vmul.f32 %v40, %v70
    %v72 = vrcp.pop %v69
    %v73 = vmul.f32 %v41, %v72
    %v75 = vlaneseq
    %v76 = vshrl.u32 %v75, 7
    %v77 = vsub.s32 0, %v76
    %v78 = vrot.slane %v66, %v77
    %v80 = vmul.f32 %v78, %v71
    %v81 = vmul.f32 %v78, %v73
    %v83 = vlaneseq
    %v84 = vshrl.u32 %v83, 7
    %v85 = vsub.s32 0, %v84
    %v86 = vrot.slane %v67, %v85
    %v88 = vadd.f32 %v80, %v86
    %v89 = vadd.f32 %v81, %v86
    %90 = vst.msk [vmem:[#allocation5] sm:$0xff] %vm31, %v88
    %91 = vst.msk [vmem:[#allocation5 + $0x8] sm:$0xff] %vm31, %v89
    // Predicated region
    $region18: #{tpu_custom_call.1} parent=1 // pred_check
      _
    $region19: #{tpu_custom_call.1} parent=1 // pred_check_branch
      %93 = sbr.rel (0) target = $region21
    $region20: #{tpu_custom_call.1} parent=1 // pred_region
      %s95 = ssub.s32 256, 256
      %96 = vsyncadd [#allocation4], %s95
      %s97 = sshll.u32 [#allocation5], 4
      %s98 = int_to_ptr.vmem [resolvable:$true] %s97
      %103 = dma.vmem_to_hbm [thread:$0]  %s98, 256, %s3, [#allocation4], 128, 128, 8
    $region21: #{tpu_custom_call.1} parent=1 // pred_fallthru
      _
    // Predicated region
    $region22: #{tpu_custom_call.1} parent=1 // pred_check
      _
    $region23: #{tpu_custom_call.1} parent=1 // pred_check_branch
      %105 = sbr.rel (0) target = $region25
    $region24: #{tpu_custom_call.1} parent=1 // pred_region
      %106 = dma.done [#allocation4], 256
    $region25: #{tpu_custom_call.1} parent=1 // pred_fallthru
      _
    %107 = vsyncpa [#allocation3], 1
    %108 = vsyncpa [#allocation4], 1

</llo_original>
